<compile_context>
chip_gen: v7x
topology: tpu7x:2x2x1
jax: 0.10.0
libtpu: 0.0.40
codegen_flags: <defaults>
</compile_context>

<pallas_src>
import functools  # noqa: F401  (kept for easy static-arg partials)

import jax
import jax.numpy as jnp
from jax.experimental import pallas as pl
from jax.experimental.pallas import tpu as pltpu


def modulation_kernel(
    b1_ref,    # (TN, 2C)  per-sample effective first-layer bias (CSI folded in)
    z_ref,     # (TR, WHp) streamed rows, TR = TN*C, row r = sample r//C, chan r%C
    w1t_ref,   # (TR, 2C)  first-layer weight (z part), pre-scaled by 1/WH, tiled TN times
    ind_ref,   # (TN, TR)  0/1 indicator: ind[n, r] = 1 iff r//C == n
    indt_ref,  # (TR, TN)  its transpose (passed separately; no in-kernel transpose)
    oneh_ref,  # (TR, C)   0/1 one-hot:  oneh[r, c] = 1 iff r%C == c
    w2m_ref,   # (C, C)
    b2m_ref,   # (1, C)
    w2a_ref,   # (C, C)
    b2a_ref,   # (1, C)
    out_ref,   # (TR, WHp)
):
    C = w2m_ref.shape[0]

    z = z_ref[...]                                        # (TR, WHp)
    zf = z.astype(jnp.float32)

    # ---- spatial mean, f32 accumulate (padding columns are zero) ----
    row_sums = jnp.sum(zf, axis=-1, keepdims=True)        # (TR, 1)

    # ---- first layer, both heads fused (h = z_mean @ [W1m_z | W1a_z] + b1_eff)
    # expressed as an indicator matmul so the big streamed block never changes
    # layout; 1/WH is folded into w1t.
    h = jnp.dot(ind_ref[...], row_sums * w1t_ref[...],
                preferred_element_type=jnp.float32) + b1_ref[...]       # (TN, 2C)
    h = jnp.maximum(h, 0.0)

    # ---- second layer, two separate (C, C) dots ----
    factor = jax.nn.sigmoid(
        jnp.dot(h[:, :C], w2m_ref[...], preferred_element_type=jnp.float32)
        + b2m_ref[...])                                                  # (TN, C)
    addition = (jnp.dot(h[:, C:], w2a_ref[...], preferred_element_type=jnp.float32)
                + b2a_ref[...])                                          # (TN, C)

    # ---- broadcast per-(sample, channel) scalars back to row space (TR, 1)
    # via indicator matmul + one-hot masked lane reduce (no reshapes).
    oneh = oneh_ref[...]
    fac_rows = jnp.sum(
        jnp.dot(indt_ref[...], factor, preferred_element_type=jnp.float32) * oneh,
        axis=-1, keepdims=True)                                          # (TR, 1)
    add_rows = jnp.sum(
        jnp.dot(indt_ref[...], addition, preferred_element_type=jnp.float32) * oneh,
        axis=-1, keepdims=True)                                          # (TR, 1)

    # ---- elementwise hot path: scale + shift, lane-dense store ----
    out_ref[...] = (zf * fac_rows + add_rows).astype(out_ref.dtype)


def init_params(key, C_channel, C_extend=1, dtype=jnp.float32):
    """Deterministic parameter init (PyTorch Linear shapes, stored as (in, out))."""
    ks = jax.random.split(key, 4)

    def lin(k, fan_in, fan_out):
        bound = 1.0 / (float(fan_in) ** 0.5)
        kw, kb = jax.random.split(k)
        w = jax.random.uniform(kw, (fan_in, fan_out), dtype, -bound, bound)
        b = jax.random.uniform(kb, (1, fan_out), dtype, -bound, bound)
        return w, b

    w1m, b1m = lin(ks[0], C_channel + C_extend, C_channel)
    w2m, b2m = lin(ks[1], C_channel, C_channel)
    w1a, b1a = lin(ks[2], C_channel + C_extend, C_channel)
    w2a, b2a = lin(ks[3], C_channel, C_channel)
    return dict(w1m=w1m, b1m=b1m, w2m=w2m, b2m=b2m,
                w1a=w1a, b1a=b1a, w2a=w2a, b2a=b2a)


def modulation_forward(z, csi, params):
    """z: (N, C, W, H), csi: (N, E) -> (N, C, W, H)."""
    N, C, W, H = z.shape
    E = csi.shape[1]
    WH = W * H
    WHp = ((WH + 127) // 128) * 128           # lane-dense (multiple of 128)
    itemsize = jnp.dtype(z.dtype).itemsize
    f32 = jnp.float32

    # ---- host-side parameter fusion (all tiny; free under XLA) ----
    w1m = params["w1m"].astype(f32)            # (C+E, C)
    w1a = params["w1a"].astype(f32)            # (C+E, C)
    w1z = jnp.concatenate([w1m[:C], w1a[:C]], axis=1)        # (C, 2C)  z_mean part
    w1c = jnp.concatenate([w1m[C:], w1a[C:]], axis=1)        # (E, 2C)  CSI part
    b1 = jnp.concatenate([params["b1m"], params["b1a"]], axis=1).astype(f32)  # (1, 2C)
    # Fold CSI into a per-sample effective first-layer bias.
    b1_eff = csi.astype(f32) @ w1c + b1                       # (N, 2C)
    w2m = params["w2m"].astype(f32)
    b2m = params["b2m"].astype(f32)
    w2a = params["w2a"].astype(f32)
    b2a = params["b2a"].astype(f32)

    # ---- layout: rows = (sample, channel), lane axis = padded spatial ----
    z_rows = z.reshape(N * C, WH)
    if WHp != WH:
        z_rows = jnp.pad(z_rows, ((0, 0), (0, WHp - WH)))

    # ---- VMEM budget and samples-per-step (TN) ----
    try:
        vmem_cap = int(pltpu.get_tpu_info().vmem_capacity_bytes)
    except Exception:
        vmem_cap = 64 * 1024 * 1024            # v7x-safe fallback
    vmem_budget = int(vmem_cap * 0.70)

    def step_bytes(tn):
        tr = tn * C
        stream = 2 * 2 * tr * WHp * itemsize                 # in + out, double-buffered
        temps = 2 * tr * WHp * 4                             # in-kernel f32 temporaries
        aux = 2 * 4 * (tr * 2 * C + 2 * tn * tr + tr * C + tn * 2 * C)  # tiled w1, ind(+T), onehot, b1_eff
        fixed = 2 * 4 * (2 * C * C + 2 * C)                  # w2m/w2a/b2m/b2a
        return stream + temps + aux + fixed + (2 << 20)      # slack

    tn = min(N, 512)
    while tn > 1 and step_bytes(tn) > vmem_budget:
        tn -= 1
    if tn < N:
        # Multi-step grid: keep block sublane dims (8, .)-aligned.
        tn = max(8, (tn // 8) * 8)
        # TODO(synk): if even 8 samples/step exceeds the VMEM budget (huge W*H),
        # add the spatially tiled two-phase fallback described at the top.
    TN = tn
    TR = TN * C
    N_pad = ((N + TN - 1) // TN) * TN
    grid = (N_pad // TN,)

    if N_pad != N:
        z_rows = jnp.pad(z_rows, ((0, (N_pad - N) * C), (0, 0)))
        b1_eff = jnp.pad(b1_eff, ((0, N_pad - N), (0, 0)))

    # ---- constant index-helper matrices (tiny, VMEM-resident) ----
    r = jnp.arange(TR)
    ind_t = (r[:, None] // C == jnp.arange(TN)[None, :]).astype(f32)   # (TR, TN)
    ind = jnp.transpose(ind_t)                                         # (TN, TR)
    onehot = (r[:, None] % C == jnp.arange(C)[None, :]).astype(f32)    # (TR, C)
    w1_tiled = jnp.tile(w1z * (1.0 / WH), (TN, 1))                     # (TR, 2C), 1/WH folded in

    # ---- BlockSpecs: stream z/out + per-step bias slab, params resident ----
    def full(shape):
        nd = len(shape)
        return pl.BlockSpec(shape, lambda i, _n=nd: (0,) * _n)

    in_specs = [
        pl.BlockSpec((TN, 2 * C), lambda i: (i, 0)),   # b1_eff
        pl.BlockSpec((TR, WHp), lambda i: (i, 0)),     # z rows (double-buffered)
        full((TR, 2 * C)),                              # w1_tiled
        full((TN, TR)),                                 # ind
        full((TR, TN)),                                 # ind_t
        full((TR, C)),                                  # onehot
        full((C, C)), full((1, C)),                     # w2m, b2m
        full((C, C)), full((1, C)),                     # w2a, b2a
    ]
    out_spec = pl.BlockSpec((TR, WHp), lambda i: (i, 0))

    vmem_limit = int(min(int(vmem_cap * 0.85),
                         max(16 * 1024 * 1024, step_bytes(TN))))

    # ---- cost hint: HBM-bound elementwise stream + tiny MLP ----
    cost = pl.CostEstimate(
        flops=int(3 * N_pad * C * WHp + 16 * N_pad * C * C + 4 * N_pad * TN * C * C),
        transcendentals=int(N_pad * C),
        bytes_accessed=int(2 * N_pad * C * WHp * itemsize + N_pad * 2 * C * 4),
    )

    out_rows = pl.pallas_call(
        modulation_kernel,
        out_shape=jax.ShapeDtypeStruct((N_pad * C, WHp), z.dtype),
        grid=grid,
        in_specs=in_specs,
        out_specs=out_spec,
        compiler_params=pltpu.CompilerParams(
            dimension_semantics=("parallel",),
            vmem_limit_bytes=vmem_limit,
        ),
        cost_estimate=cost,
    )(b1_eff, z_rows, w1_tiled, ind, ind_t, onehot, w2m, b2m, w2a, b2a)

    return out_rows[: N * C, :WH].reshape(N, C, W, H)


def modulation_reference(z, csi, params):
    """Pure-JAX reference matching the PyTorch forward exactly."""
    z_mean = jnp.mean(z, axis=(-2, -1))                         # (N, C)
    z_cat = jnp.concatenate([z_mean, csi], axis=-1)             # (N, C+E)
    h_m = jnp.maximum(z_cat @ params["w1m"] + params["b1m"], 0.0)
    factor = jax.nn.sigmoid(h_m @ params["w2m"] + params["b2m"])
    h_a = jnp.maximum(z_cat @ params["w1a"] + params["b1a"], 0.0)
    addition = h_a @ params["w2a"] + params["b2a"]
    return z * factor[:, :, None, None] + addition[:, :, None, None]


if __name__ == "__main__":
    N, C, W, H = 2, 4, 16, 16
    C_extend = 1

    key = jax.random.PRNGKey(0)
    kz, kc, kp = jax.random.split(key, 3)
    z = jax.random.normal(kz, (N, C, W, H), jnp.float32)
    csi = jax.random.normal(kc, (N, C_extend), jnp.float32)
    params = init_params(kp, C, C_extend)

    out = jax.block_until_ready(modulation_forward(z, csi, params))
    ref = modulation_reference(z, csi, params)

    assert out.shape == (N, C, W, H)
    assert jnp.allclose(out, ref, atol=1e-5, rtol=1e-5), "mismatch vs reference"

    print("KERNEL_OK")
</pallas_src>

<mosaic_0001>
module attributes {stable_mosaic.version = 11 : i64} {
  func.func @modulation_kernel(%arg0: i32, %arg1: memref<2x8xf32, #tpu.memory_space<vmem>>, %arg2: memref<8x256xf32, #tpu.memory_space<vmem>>, %arg3: memref<8x8xf32, #tpu.memory_space<vmem>>, %arg4: memref<2x8xf32, #tpu.memory_space<vmem>>, %arg5: memref<8x2xf32, #tpu.memory_space<vmem>>, %arg6: memref<8x4xf32, #tpu.memory_space<vmem>>, %arg7: memref<4x4xf32, #tpu.memory_space<vmem>>, %arg8: memref<1x4xf32, #tpu.memory_space<vmem>>, %arg9: memref<4x4xf32, #tpu.memory_space<vmem>>, %arg10: memref<1x4xf32, #tpu.memory_space<vmem>>, %arg11: memref<8x256xf32, #tpu.memory_space<vmem>>) attributes {dimension_semantics = [#tpu.dimension_semantics<parallel>], iteration_bounds = array<i64: 1>, scalar_prefetch = 0 : i64, scratch_operands = 0 : i64, tpu.core_type = #tpu.core_type<tc>, window_params = [{transform_indices = @transform_0, window_bounds = array<i64: 2, 8>}, {transform_indices = @transform_1, window_bounds = array<i64: 8, 256>}, {pipeline_mode = #tpu.pipeline_mode<synchronous>, transform_indices = @transform_2, window_bounds = array<i64: 8, 8>}, {pipeline_mode = #tpu.pipeline_mode<synchronous>, transform_indices = @transform_3, window_bounds = array<i64: 2, 8>}, {pipeline_mode = #tpu.pipeline_mode<synchronous>, transform_indices = @transform_4, window_bounds = array<i64: 8, 2>}, {pipeline_mode = #tpu.pipeline_mode<synchronous>, transform_indices = @transform_5, window_bounds = array<i64: 8, 4>}, {pipeline_mode = #tpu.pipeline_mode<synchronous>, transform_indices = @transform_6, window_bounds = array<i64: 4, 4>}, {pipeline_mode = #tpu.pipeline_mode<synchronous>, transform_indices = @transform_7, window_bounds = array<i64: 1, 4>}, {pipeline_mode = #tpu.pipeline_mode<synchronous>, transform_indices = @transform_8, window_bounds = array<i64: 4, 4>}, {pipeline_mode = #tpu.pipeline_mode<synchronous>, transform_indices = @transform_9, window_bounds = array<i64: 1, 4>}, {transform_indices = @transform_10, window_bounds = array<i64: 8, 256>}]} {
    %c0 = arith.constant 0 : index
    %c0_0 = arith.constant 0 : index
    %0 = vector.load %arg2[%c0, %c0_0] : memref<8x256xf32, #tpu.memory_space<vmem>>, vector<8x256xf32>
    %cst = arith.constant dense<0.000000e+00> : vector<8xf32>
    %1 = vector.multi_reduction <add>, %0, %cst [1] : vector<8x256xf32> to vector<8xf32>
    %2 = vector.shape_cast %1 : vector<8xf32> to vector<8x1xf32>
    %c0_1 = arith.constant 0 : index
    %c0_2 = arith.constant 0 : index
    %3 = vector.load %arg4[%c0_1, %c0_2] : memref<2x8xf32, #tpu.memory_space<vmem>>, vector<2x8xf32>
    %c0_3 = arith.constant 0 : index
    %c0_4 = arith.constant 0 : index
    %4 = vector.load %arg3[%c0_3, %c0_4] : memref<8x8xf32, #tpu.memory_space<vmem>>, vector<8x8xf32>
    %5 = vector.broadcast %2 : vector<8x1xf32> to vector<8x8xf32>
    %6 = arith.mulf %5, %4 : vector<8x8xf32>
    %cst_5 = arith.constant dense<0.000000e+00> : vector<2x8xf32>
    %7 = tpu.matmul %3, %6, %cst_5 {dimension_numbers = #tpu.dot_dimension_numbers<[1], [0], [0], [1], [0, 0, 1, 1], [], []>} : vector<2x8xf32>, vector<8x8xf32>, vector<2x8xf32> -> vector<2x8xf32>
    %c0_6 = arith.constant 0 : index
    %c0_7 = arith.constant 0 : index
    %8 = vector.load %arg1[%c0_6, %c0_7] : memref<2x8xf32, #tpu.memory_space<vmem>>, vector<2x8xf32>
    %9 = arith.addf %7, %8 : vector<2x8xf32>
    %cst_8 = arith.constant 0.000000e+00 : f32
    %10 = vector.broadcast %cst_8 : f32 to vector<2x8xf32>
    %11 = arith.maximumf %9, %10 : vector<2x8xf32>
    %12 = vector.extract_strided_slice %11 {offsets = [0, 0], sizes = [2, 4], strides = [1, 1]} : vector<2x8xf32> to vector<2x4xf32>
    %c0_9 = arith.constant 0 : index
    %c0_10 = arith.constant 0 : index
    %13 = vector.load %arg7[%c0_9, %c0_10] : memref<4x4xf32, #tpu.memory_space<vmem>>, vector<4x4xf32>
    %cst_11 = arith.constant dense<0.000000e+00> : vector<2x4xf32>
    %14 = tpu.matmul %12, %13, %cst_11 {dimension_numbers = #tpu.dot_dimension_numbers<[1], [0], [0], [1], [0, 0, 1, 1], [], []>} : vector<2x4xf32>, vector<4x4xf32>, vector<2x4xf32> -> vector<2x4xf32>
    %c0_12 = arith.constant 0 : index
    %c0_13 = arith.constant 0 : index
    %15 = vector.load %arg8[%c0_12, %c0_13] : memref<1x4xf32, #tpu.memory_space<vmem>>, vector<1x4xf32>
    %16 = vector.broadcast %15 : vector<1x4xf32> to vector<2x4xf32>
    %17 = arith.addf %14, %16 : vector<2x4xf32>
    %18 = arith.negf %17 : vector<2x4xf32>
    %19 = math.exp %18 : vector<2x4xf32>
    %cst_14 = arith.constant 1.000000e+00 : f32
    %20 = vector.broadcast %cst_14 : f32 to vector<2x4xf32>
    %21 = arith.addf %20, %19 : vector<2x4xf32>
    %22 = arith.divf %20, %21 : vector<2x4xf32>
    %23 = vector.extract_strided_slice %11 {offsets = [0, 4], sizes = [2, 4], strides = [1, 1]} : vector<2x8xf32> to vector<2x4xf32>
    %c0_15 = arith.constant 0 : index
    %c0_16 = arith.constant 0 : index
    %24 = vector.load %arg9[%c0_15, %c0_16] : memref<4x4xf32, #tpu.memory_space<vmem>>, vector<4x4xf32>
    %cst_17 = arith.constant dense<0.000000e+00> : vector<2x4xf32>
    %25 = tpu.matmul %23, %24, %cst_17 {dimension_numbers = #tpu.dot_dimension_numbers<[1], [0], [0], [1], [0, 0, 1, 1], [], []>} : vector<2x4xf32>, vector<4x4xf32>, vector<2x4xf32> -> vector<2x4xf32>
    %c0_18 = arith.constant 0 : index
    %c0_19 = arith.constant 0 : index
    %26 = vector.load %arg10[%c0_18, %c0_19] : memref<1x4xf32, #tpu.memory_space<vmem>>, vector<1x4xf32>
    %27 = vector.broadcast %26 : vector<1x4xf32> to vector<2x4xf32>
    %28 = arith.addf %25, %27 : vector<2x4xf32>
    %c0_20 = arith.constant 0 : index
    %c0_21 = arith.constant 0 : index
    %29 = vector.load %arg6[%c0_20, %c0_21] : memref<8x4xf32, #tpu.memory_space<vmem>>, vector<8x4xf32>
    %c0_22 = arith.constant 0 : index
    %c0_23 = arith.constant 0 : index
    %30 = vector.load %arg5[%c0_22, %c0_23] : memref<8x2xf32, #tpu.memory_space<vmem>>, vector<8x2xf32>
    %cst_24 = arith.constant dense<0.000000e+00> : vector<8x4xf32>
    %31 = tpu.matmul %30, %22, %cst_24 {dimension_numbers = #tpu.dot_dimension_numbers<[1], [0], [0], [1], [0, 0, 1, 1], [], []>} : vector<8x2xf32>, vector<2x4xf32>, vector<8x4xf32> -> vector<8x4xf32>
    %32 = arith.mulf %31, %29 : vector<8x4xf32>
    %cst_25 = arith.constant dense<0.000000e+00> : vector<8xf32>
    %33 = vector.multi_reduction <add>, %32, %cst_25 [1] : vector<8x4xf32> to vector<8xf32>
    %34 = vector.shape_cast %33 : vector<8xf32> to vector<8x1xf32>
    %c0_26 = arith.constant 0 : index
    %c0_27 = arith.constant 0 : index
    %35 = vector.load %arg5[%c0_26, %c0_27] : memref<8x2xf32, #tpu.memory_space<vmem>>, vector<8x2xf32>
    %cst_28 = arith.constant dense<0.000000e+00> : vector<8x4xf32>
    %36 = tpu.matmul %35, %28, %cst_28 {dimension_numbers = #tpu.dot_dimension_numbers<[1], [0], [0], [1], [0, 0, 1, 1], [], []>} : vector<8x2xf32>, vector<2x4xf32>, vector<8x4xf32> -> vector<8x4xf32>
    %37 = arith.mulf %36, %29 : vector<8x4xf32>
    %cst_29 = arith.constant dense<0.000000e+00> : vector<8xf32>
    %38 = vector.multi_reduction <add>, %37, %cst_29 [1] : vector<8x4xf32> to vector<8xf32>
    %39 = vector.shape_cast %38 : vector<8xf32> to vector<8x1xf32>
    %40 = vector.broadcast %34 : vector<8x1xf32> to vector<8x256xf32>
    %41 = arith.mulf %0, %40 : vector<8x256xf32>
    %42 = vector.broadcast %39 : vector<8x1xf32> to vector<8x256xf32>
    %43 = arith.addf %41, %42 : vector<8x256xf32>
    %c0_30 = arith.constant 0 : index
    %c0_31 = arith.constant 0 : index
    %44 = vector.load %arg11[%c0_30, %c0_31] : memref<8x256xf32, #tpu.memory_space<vmem>>, vector<8x256xf32>
    tpu.vector_store %arg11[%c0_30, %c0_31], %43 {strides = array<i32>} : memref<8x256xf32, #tpu.memory_space<vmem>>, vector<8x256xf32>,
    return
  }
  func.func @transform_0(%arg0: i32) -> (i32, i32) {
    %c0_i32 = arith.constant 0 : i32
    %c0_i32_0 = arith.constant 0 : i32
    return %arg0, %c0_i32 : i32, i32
  }
  func.func @transform_1(%arg0: i32) -> (i32, i32) {
    %c0_i32 = arith.constant 0 : i32
    %c0_i32_0 = arith.constant 0 : i32
    return %arg0, %c0_i32 : i32, i32
  }
  func.func @transform_2(%arg0: i32) -> (i32, i32) {
    %c0_i32 = arith.constant 0 : i32
    %c0_i32_0 = arith.constant 0 : i32
    %c0_i32_1 = arith.constant 0 : i32
    return %c0_i32, %c0_i32_0 : i32, i32
  }
  func.func @transform_3(%arg0: i32) -> (i32, i32) {
    %c0_i32 = arith.constant 0 : i32
    %c0_i32_0 = arith.constant 0 : i32
    %c0_i32_1 = arith.constant 0 : i32
    return %c0_i32, %c0_i32_0 : i32, i32
  }
  func.func @transform_4(%arg0: i32) -> (i32, i32) {
    %c0_i32 = arith.constant 0 : i32
    %c0_i32_0 = arith.constant 0 : i32
    %c0_i32_1 = arith.constant 0 : i32
    return %c0_i32, %c0_i32_0 : i32, i32
  }
  func.func @transform_5(%arg0: i32) -> (i32, i32) {
    %c0_i32 = arith.constant 0 : i32
    %c0_i32_0 = arith.constant 0 : i32
    %c0_i32_1 = arith.constant 0 : i32
    return %c0_i32, %c0_i32_0 : i32, i32
  }
  func.func @transform_6(%arg0: i32) -> (i32, i32) {
    %c0_i32 = arith.constant 0 : i32
    %c0_i32_0 = arith.constant 0 : i32
    %c0_i32_1 = arith.constant 0 : i32
    return %c0_i32, %c0_i32_0 : i32, i32
  }
  func.func @transform_7(%arg0: i32) -> (i32, i32) {
    %c0_i32 = arith.constant 0 : i32
    %c0_i32_0 = arith.constant 0 : i32
    %c0_i32_1 = arith.constant 0 : i32
    return %c0_i32, %c0_i32_0 : i32, i32
  }
  func.func @transform_8(%arg0: i32) -> (i32, i32) {
    %c0_i32 = arith.constant 0 : i32
    %c0_i32_0 = arith.constant 0 : i32
    %c0_i32_1 = arith.constant 0 : i32
    return %c0_i32, %c0_i32_0 : i32, i32
  }
  func.func @transform_9(%arg0: i32) -> (i32, i32) {
    %c0_i32 = arith.constant 0 : i32
    %c0_i32_0 = arith.constant 0 : i32
    %c0_i32_1 = arith.constant 0 : i32
    return %c0_i32, %c0_i32_0 : i32, i32
  }
  func.func @transform_10(%arg0: i32) -> (i32, i32) {
    %c0_i32 = arith.constant 0 : i32
    %c0_i32_0 = arith.constant 0 : i32
    return %arg0, %c0_i32 : i32, i32
  }
}

</mosaic_0001>

<llo_original>
// kernel: tpu_custom_call.1
$region0: #{tpu_custom_call.1}
  #allocation0 [shape = 'u32[]', space=smem, size = 0x4, offset = 0x4, fixed_abs, tag = 'smem constant byte address 0x4 - core index']
  #allocation1 [shape = 'u32[144,128]{1,0:T(1,128)}', space=vmem, size = 0x12000, scoped, tag = 'internal scratch']
  %s0 = inlined_call_operand.hbm [shape: f32[2,8], index: 0, kind: input, shape index: {}]
  %s1 = inlined_call_operand.vmem [shape: f32[8,256], index: 1, kind: input, shape index: {}]
  %s2 = inlined_call_operand.vmem [shape: f32[8,8], index: 2, kind: input, shape index: {}]
  %s3 = inlined_call_operand.hbm [shape: f32[2,8], index: 3, kind: input, shape index: {}]
  %s4 = inlined_call_operand.vmem [shape: f32[8,2], index: 4, kind: input, shape index: {}]
  %s5 = inlined_call_operand.vmem [shape: f32[8,4], index: 5, kind: input, shape index: {}]
  %s6 = inlined_call_operand.vmem [shape: f32[4,4], index: 6, kind: input, shape index: {}]
  %s7 = inlined_call_operand.vmem [shape: f32[1,4], index: 7, kind: input, shape index: {}]
  %s8 = inlined_call_operand.vmem [shape: f32[4,4], index: 8, kind: input, shape index: {}]
  %s9 = inlined_call_operand.vmem [shape: f32[1,4], index: 9, kind: input, shape index: {}]
  %s10 = inlined_call_operand.hbm [shape: f32[8,256], index: 10, kind: output, shape index: {}]
  %s11 = sld [smem:[#allocation0]]
  $region58: #{tpu_custom_call.1} parent=0
    _
  %s13 = ssub.s32 1, %s11
  %s14 = scalar_select 0, %s13, %s11
  $region1: #{tpu_custom_call.1} parent=0
    #allocation2 [shape = 'u8[1024]{0}', space=vmem, size = 0x400, scoped, tag = 'input window, operand 0, single buffered']
    #allocation3 [shape = 's32[1]{0}', space=sflag, size = 0x4, scoped, tag = 'scoped memory for tpu_custom_call.1']
    #allocation4 [shape = 's32[1]{0}', space=sflag, size = 0x4, scoped, tag = 'scoped memory for tpu_custom_call.1']
    #allocation5 [shape = 'u8[1024]{0}', space=vmem, size = 0x400, scoped, tag = 'input window, operand 3, single buffered']
    #allocation6 [shape = 's32[1]{0}', space=sflag, size = 0x4, scoped, tag = 'scoped memory for tpu_custom_call.1']
    #allocation7 [shape = 'u8[8192]{0}', space=vmem, size = 0x2000, scoped, tag = 'output window, operand 0, single buffered']
    %15 = vsyncpa [#allocation3], 0
    %16 = vsyncpa [#allocation6], 0
    %17 = vsyncpa [#allocation4], 0
    // Predicated region
    $region2: #{tpu_custom_call.1} parent=1 // pred_check
      _
    $region3: #{tpu_custom_call.1} parent=1 // pred_check_branch
      %19 = sbr.rel (0) target = $region5
    $region4: #{tpu_custom_call.1} parent=1 // pred_region
      %s21 = ssub.s32 32, 32
      %22 = vsyncadd [#allocation3], %s21
      %s24 = sshll.u32 [#allocation2], 4
      %s25 = int_to_ptr.vmem [resolvable:$true] %s24
      %27 = dma.hbm_to_vmem [thread:$0]  %s0, 32, %s25, [#allocation3]
    $region5: #{tpu_custom_call.1} parent=1 // pred_fallthru
      _
    // Predicated region
    $region6: #{tpu_custom_call.1} parent=1 // pred_check
      _
    $region7: #{tpu_custom_call.1} parent=1 // pred_check_branch
      %29 = sbr.rel (0) target = $region9
    $region8: #{tpu_custom_call.1} parent=1 // pred_region
      _
    $region9: #{tpu_custom_call.1} parent=1 // pred_fallthru
      _
    // Predicated region
    $region10: #{tpu_custom_call.1} parent=1 // pred_check
      _
    $region11: #{tpu_custom_call.1} parent=1 // pred_check_branch
      %31 = sbr.rel (0) target = $region13
    $region12: #{tpu_custom_call.1} parent=1 // pred_region
      _
    $region13: #{tpu_custom_call.1} parent=1 // pred_fallthru
      _
    // Predicated region
    $region14: #{tpu_custom_call.1} parent=1 // pred_check
      _
    $region15: #{tpu_custom_call.1} parent=1 // pred_check_branch
      %33 = sbr.rel (0) target = $region17
    $region16: #{tpu_custom_call.1} parent=1 // pred_region
      %s35 = ssub.s32 32, 32
      %36 = vsyncadd [#allocation6], %s35
      %s38 = sshll.u32 [#allocation5], 4
      %s39 = int_to_ptr.vmem [resolvable:$true] %s38
      %41 = dma.hbm_to_vmem [thread:$0]  %s3, 32, %s39, [#allocation6]
    $region17: #{tpu_custom_call.1} parent=1 // pred_fallthru
      _
    // Predicated region
    $region18: #{tpu_custom_call.1} parent=1 // pred_check
      _
    $region19: #{tpu_custom_call.1} parent=1 // pred_check_branch
      %43 = sbr.rel (0) target = $region21
    $region20: #{tpu_custom_call.1} parent=1 // pred_region
      _
    $region21: #{tpu_custom_call.1} parent=1 // pred_fallthru
      _
    // Predicated region
    $region22: #{tpu_custom_call.1} parent=1 // pred_check
      _
    $region23: #{tpu_custom_call.1} parent=1 // pred_check_branch
      %45 = sbr.rel (0) target = $region25
    $region24: #{tpu_custom_call.1} parent=1 // pred_region
      _
    $region25: #{tpu_custom_call.1} parent=1 // pred_fallthru
      _
    // Predicated region
    $region26: #{tpu_custom_call.1} parent=1 // pred_check
      _
    $region27: #{tpu_custom_call.1} parent=1 // pred_check_branch
      %47 = sbr.rel (0) target = $region29
    $region28: #{tpu_custom_call.1} parent=1 // pred_region
      _
    $region29: #{tpu_custom_call.1} parent=1 // pred_fallthru
      _
    // Predicated region
    $region30: #{tpu_custom_call.1} parent=1 // pred_check
      _
    $region31: #{tpu_custom_call.1} parent=1 // pred_check_branch
      %49 = sbr.rel (0) target = $region33
    $region32: #{tpu_custom_call.1} parent=1 // pred_region
      _
    $region33: #{tpu_custom_call.1} parent=1 // pred_fallthru
      _
    // Predicated region
    $region34: #{tpu_custom_call.1} parent=1 // pred_check
      _
    $region35: #{tpu_custom_call.1} parent=1 // pred_check_branch
      %51 = sbr.rel (0) target = $region37
    $region36: #{tpu_custom_call.1} parent=1 // pred_region
      _
    $region37: #{tpu_custom_call.1} parent=1 // pred_fallthru
      _
    // Predicated region
    $region38: #{tpu_custom_call.1} parent=1 // pred_check
      _
    $region39: #{tpu_custom_call.1} parent=1 // pred_check_branch
      %53 = sbr.rel (0) target = $region41
    $region40: #{tpu_custom_call.1} parent=1 // pred_region
      _
    $region41: #{tpu_custom_call.1} parent=1 // pred_fallthru
      _
    // Predicated region
    $region42: #{tpu_custom_call.1} parent=1 // pred_check
      _
    $region43: #{tpu_custom_call.1} parent=1 // pred_check_branch
      %55 = sbr.rel (0) target = $region45
    $region44: #{tpu_custom_call.1} parent=1 // pred_region
      %56 = dma.done [#allocation3], 32
    $region45: #{tpu_custom_call.1} parent=1 // pred_fallthru
      _
    // Predicated region
    $region46: #{tpu_custom_call.1} parent=1 // pred_check
      _
    $region47: #{tpu_custom_call.1} parent=1 // pred_check_branch
      %58 = sbr.rel (0) target = $region49
    $region48: #{tpu_custom_call.1} parent=1 // pred_region
      %59 = dma.done [#allocation6], 32
    $region49: #{tpu_custom_call.1} parent=1 // pred_fallthru
      _
    %v60 = vld [vmem:[%s1] sm:$0xff]
    %v61 = vld [vmem:[%s1 + $0x8] sm:$0xff]
    %v62 = vadd.f32 %v60, %v61
    %63 = vadd.xlane.f32.xlu0 %v62
    %v64 = vpop.xlane.xlu0 %63
    %v65 = vld [vmem:[#allocation5] sm:$0x3]
    %v66 = vld [vmem:[%s2] sm:$0xff]
    %v67 = vmul.f32 %v64, %v66
    %v68 = vld [vmem:[#allocation2] sm:$0x3]
    %vm69 = vcmask 64512
    %v71 = vsel %vm69, %v65, 0
    %73 = vmatprep.subr.mxu0 0.0
    %74 = vmatpush1.msra.mxu0 %v67
    %75 = vmatprep.subr.mxu0 0.0
    %76 = vmatpush1.msra.mxu0 0.0
    %77 = vmatprep.subr.mxu0 0.0
    %78 = vmatpush1.msra.mxu0 0.0
    %79 = vmatprep.subr.mxu0 0.0
    %80 = vmatpush1.msra.mxu0 0.0
    %81 = vmatprep.subr.mxu0 0.0
    %82 = vmatpush1.msra.mxu0 0.0
    %83 = vmatprep.subr.mxu0 0.0
    %84 = vmatpush1.msra.mxu0 0.0
    %85 = vmatprep.subr.mxu0 0.0
    %86 = vmatpush1.msra.mxu0 0.0
    %87 = vmatprep.subr.mxu0 0.0
    %88 = vmatpush1.msra.mxu0 0.0
    %89 = vmatprep.subr.mxu0 0.0
    %90 = vmatpush1.msra.mxu0 0.0
    %91 = vmatprep.subr.mxu0 0.0
    %92 = vmatpush1.msra.mxu0 0.0
    %93 = vmatprep.subr.mxu0 0.0
    %94 = vmatpush1.msra.mxu0 0.0
    %95 = vmatprep.subr.mxu0 0.0
    %96 = vmatpush1.msra.mxu0 0.0
    %97 = vmatprep.subr.mxu0 0.0
    %98 = vmatpush1.msra.mxu0 0.0
    %99 = vmatprep.subr.mxu0 0.0
    %100 = vmatpush1.msra.mxu0 0.0
    %101 = vmatprep.subr.mxu0 0.0
    %102 = vmatpush1.msra.mxu0 0.0
    %103 = vmatprep.subr.mxu0 0.0
    %104 = vmatpush1.msra.mxu0 0.0
    %105 = vmatprep.subr.mxu0 0.0
    %106 = vmatpush1.msra.mxu0 0.0
    %107 = vmatprep.subr.mxu0 0.0
    %108 = vmatpush1.msra.mxu0 0.0
    %109 = vmatprep.subr.mxu0 0.0
    %110 = vmatpush1.msra.mxu0 0.0
    %111 = vmatprep.subr.mxu0 0.0
    %112 = vmatpush1.msra.mxu0 0.0
    %113 = vmatprep.subr.mxu0 0.0
    %114 = vmatpush1.msra.mxu0 0.0
    %115 = vmatprep.subr.mxu0 0.0
    %116 = vmatpush1.msra.mxu0 0.0
    %117 = vmatprep.subr.mxu0 0.0
    %118 = vmatpush1.msra.mxu0 0.0
    %119 = vmatprep.subr.mxu0 0.0
    %120 = vmatpush1.msra.mxu0 0.0
    %121 = vmatprep.subr.mxu0 0.0
    %122 = vmatpush1.msra.mxu0 0.0
    %123 = vmatprep.subr.mxu0 0.0
    %124 = vmatpush1.msra.mxu0 0.0
    %125 = vmatprep.subr.mxu0 0.0
    %126 = vmatpush1.msra.mxu0 0.0
    %127 = vmatprep.subr.mxu0 0.0
    %128 = vmatpush1.msra.mxu0 0.0
    %129 = vmatprep.subr.mxu0 0.0
    %130 = vmatpush1.msra.mxu0 0.0
    %131 = vmatprep.subr.mxu0 0.0
    %132 = vmatpush1.msra.mxu0 0.0
    %133 = vmatprep.subr.mxu0 0.0
    %134 = vmatpush1.msra.mxu0 0.0
    %135 = vmatprep.subr.mxu0 0.0
    %136 = vmatpush1.msra.mxu0 0.0
    %137 = vmatprep.mubr.f32.mxu0 0.0
    %138 = vmatmul.mubr.f32.gmra.mrb[0].mxu0 %v71
    %v139 = vpop.f32.mrb[0].mxu0
    %v140 = vadd.f32 %v68, %v139
    %v141 = vpop.f32.mrb[0].mxu0
    %142 = vdwg.mxu0
    %v143 = vmax.f32 %v140, 0.0
    %v144 = vld [vmem:[%s6] sm:$0xf]
    %v145 = vld [vmem:[%s7] sm:$0x1]
    %v147 = vlaneseq
    %v148 = vshrl.u32 %v147, 7
    %v149 = vsub.s32 0, %v148
    %v150 = vrot.slane %v145, %v149
    %vm152 = vcmask 31744
    %v154 = vsel %vm152, %v143, 0
    %vm156 = vcmask 1043456
    %v158 = vsel %vm156, %v144, 0
    %160 = vmatprep.subr.mxu0 0.0
    %161 = vmatpush1.msra.mxu0 %v158
    %162 = vmatprep.subr.mxu0 0.0
    %163 = vmatpush1.msra.mxu0 0.0
    %164 = vmatprep.subr.mxu0 0.0
    %165 = vmatpush1.msra.mxu0 0.0
    %166 = vmatprep.subr.mxu0 0.0
    %167 = vmatpush1.msra.mxu0 0.0
    %168 = vmatprep.subr.mxu0 0.0
    %169 = vmatpush1.msra.mxu0 0.0
    %170 = vmatprep.subr.mxu0 0.0
    %171 = vmatpush1.msra.mxu0 0.0
    %172 = vmatprep.subr.mxu0 0.0
    %173 = vmatpush1.msra.mxu0 0.0
    %174 = vmatprep.subr.mxu0 0.0
    %175 = vmatpush1.msra.mxu0 0.0
    %176 = vmatprep.subr.mxu0 0.0
    %177 = vmatpush1.msra.mxu0 0.0
    %178 = vmatprep.subr.mxu0 0.0
    %179 = vmatpush1.msra.mxu0 0.0
    %180 = vmatprep.subr.mxu0 0.0
    %181 = vmatpush1.msra.mxu0 0.0
    %182 = vmatprep.subr.mxu0 0.0
    %183 = vmatpush1.msra.mxu0 0.0
    %184 = vmatprep.subr.mxu0 0.0
    %185 = vmatpush1.msra.mxu0 0.0
    %186 = vmatprep.subr.mxu0 0.0
    %187 = vmatpush1.msra.mxu0 0.0
    %188 = vmatprep.subr.mxu0 0.0
    %189 = vmatpush1.msra.mxu0 0.0
    %190 = vmatprep.subr.mxu0 0.0
    %191 = vmatpush1.msra.mxu0 0.0
    %192 = vmatprep.subr.mxu0 0.0
    %193 = vmatpush1.msra.mxu0 0.0
    %194 = vmatprep.subr.mxu0 0.0
    %195 = vmatpush1.msra.mxu0 0.0
    %196 = vmatprep.subr.mxu0 0.0
    %197 = vmatpush1.msra.mxu0 0.0
    %198 = vmatprep.subr.mxu0 0.0
    %199 = vmatpush1.msra.mxu0 0.0
    %200 = vmatprep.subr.mxu0 0.0
    %201 = vmatpush1.msra.mxu0 0.0
    %202 = vmatprep.subr.mxu0 0.0
    %203 = vmatpush1.msra.mxu0 0.0
    %204 = vmatprep.subr.mxu0 0.0
    %205 = vmatpush1.msra.mxu0 0.0
    %206 = vmatprep.subr.mxu0 0.0
    %207 = vmatpush1.msra.mxu0 0.0
    %208 = vmatprep.subr.mxu0 0.0
    %209 = vmatpush1.msra.mxu0 0.0
    %210 = vmatprep.subr.mxu0 0.0
    %211 = vmatpush1.msra.mxu0 0.0
    %212 = vmatprep.subr.mxu0 0.0
    %213 = vmatpush1.msra.mxu0 0.0
    %214 = vmatprep.subr.mxu0 0.0
    %215 = vmatpush1.msra.mxu0 0.0
    %216 = vmatprep.subr.mxu0 0.0
    %217 = vmatpush1.msra.mxu0 0.0
    %218 = vmatprep.subr.mxu0 0.0
    %219 = vmatpush1.msra.mxu0 0.0
    %220 = vmatprep.subr.mxu0 0.0
    %221 = vmatpush1.msra.mxu0 0.0
    %222 = vmatprep.subr.mxu0 0.0
    %223 = vmatpush1.msra.mxu0 0.0
    %224 = vmatprep.mubr.f32.mxu0 0.0
    %225 = vmatmul.mubr.f32.gmra.mrb[0].mxu0 %v154
    %v226 = vpop.f32.mrb[0].mxu0
    %v227 = vadd.f32 %v150, %v226
    %v228 = vpop.f32.mrb[0].mxu0
    %229 = vdwg.mxu0
    %v230 = vxor.u32 %v227, 2147483648
    %v231 = vmul.f32 %v230, 1.442695
    %v232 = vpow.pop %v231
    %v233 = vadd.f32 %v232, 1.0
    %v234 = vrcp.pop %v233
    %v235 = vmul.f32 1.0, %v234
    %v236 = vld [vmem:[%s8] sm:$0xf]
    %v237 = vld [vmem:[%s9] sm:$0x1]
    %v239 = vlaneseq
    %v240 = vshrl.u32 %v239, 7
    %v241 = vsub.s32 0, %v240
    %v242 = vrot.slane %v237, %v241
    %244 = vrot.lane.b32.xlu0 %v143, 124
    %v245 = vpop.permute.xlu0 %244
    %v246 = vsel %vm152, %v245, 0
    %v249 = vsel %vm156, %v236, 0
    %251 = vmatprep.subr.mxu0 0.0
    %252 = vmatpush1.msra.mxu0 %v249
    %253 = vmatprep.subr.mxu0 0.0
    %254 = vmatpush1.msra.mxu0 0.0
    %255 = vmatprep.subr.mxu0 0.0
    %256 = vmatpush1.msra.mxu0 0.0
    %257 = vmatprep.subr.mxu0 0.0
    %258 = vmatpush1.msra.mxu0 0.0
    %259 = vmatprep.subr.mxu0 0.0
    %260 = vmatpush1.msra.mxu0 0.0
    %261 = vmatprep.subr.mxu0 0.0
    %262 = vmatpush1.msra.mxu0 0.0
    %263 = vmatprep.subr.mxu0 0.0
    %264 = vmatpush1.msra.mxu0 0.0
    %265 = vmatprep.subr.mxu0 0.0
    %266 = vmatpush1.msra.mxu0 0.0
    %267 = vmatprep.subr.mxu0 0.0
    %268 = vmatpush1.msra.mxu0 0.0
    %269 = vmatprep.subr.mxu0 0.0
    %270 = vmatpush1.msra.mxu0 0.0
    %271 = vmatprep.subr.mxu0 0.0
    %272 = vmatpush1.msra.mxu0 0.0
    %273 = vmatprep.subr.mxu0 0.0
    %274 = vmatpush1.msra.mxu0 0.0
    %275 = vmatprep.subr.mxu0 0.0
    %276 = vmatpush1.msra.mxu0 0.0
    %277 = vmatprep.subr.mxu0 0.0
    %278 = vmatpush1.msra.mxu0 0.0
    %279 = vmatprep.subr.mxu0 0.0
    %280 = vmatpush1.msra.mxu0 0.0
    %281 = vmatprep.subr.mxu0 0.0
    %282 = vmatpush1.msra.mxu0 0.0
    %283 = vmatprep.subr.mxu0 0.0
    %284 = vmatpush1.msra.mxu0 0.0
    %285 = vmatprep.subr.mxu0 0.0
    %286 = vmatpush1.msra.mxu0 0.0
    %287 = vmatprep.subr.mxu0 0.0
    %288 = vmatpush1.msra.mxu0 0.0
    %289 = vmatprep.subr.mxu0 0.0
    %290 = vmatpush1.msra.mxu0 0.0
    %291 = vmatprep.subr.mxu0 0.0
    %292 = vmatpush1.msra.mxu0 0.0
    %293 = vmatprep.subr.mxu0 0.0
    %294 = vmatpush1.msra.mxu0 0.0
    %295 = vmatprep.subr.mxu0 0.0
    %296 = vmatpush1.msra.mxu0 0.0
    %297 = vmatprep.subr.mxu0 0.0
    %298 = vmatpush1.msra.mxu0 0.0
    %299 = vmatprep.subr.mxu0 0.0
    %300 = vmatpush1.msra.mxu0 0.0
    %301 = vmatprep.subr.mxu0 0.0
    %302 = vmatpush1.msra.mxu0 0.0
    %303 = vmatprep.subr.mxu0 0.0
    %304 = vmatpush1.msra.mxu0 0.0
    %305 = vmatprep.subr.mxu0 0.0
    %306 = vmatpush1.msra.mxu0 0.0
    %307 = vmatprep.subr.mxu0 0.0
    %308 = vmatpush1.msra.mxu0 0.0
    %309 = vmatprep.subr.mxu0 0.0
    %310 = vmatpush1.msra.mxu0 0.0
    %311 = vmatprep.subr.mxu0 0.0
    %312 = vmatpush1.msra.mxu0 0.0
    %313 = vmatprep.subr.mxu0 0.0
    %314 = vmatpush1.msra.mxu0 0.0
    %315 = vmatprep.mubr.f32.mxu0 0.0
    %316 = vmatmul.mubr.f32.gmra.mrb[0].mxu0 %v246
    %v317 = vpop.f32.mrb[0].mxu0
    %v318 = vadd.f32 %v242, %v317
    %v319 = vpop.f32.mrb[0].mxu0
    %320 = vdwg.mxu0
    %v321 = vld [vmem:[%s5] sm:$0xff]
    %v322 = vld [vmem:[%s4] sm:$0xff]
    %vm323 = vcmask 15360
    %v325 = vsel %vm323, %v322, 0
    %vm327 = vcmask 1041408
    %v329 = vsel %vm327, %v235, 0
    %331 = vmatprep.subr.mxu0 0.0
    %332 = vmatpush1.msra.mxu0 %v329
    %333 = vmatprep.subr.mxu0 0.0
    %334 = vmatpush1.msra.mxu0 0.0
    %335 = vmatprep.subr.mxu0 0.0
    %336 = vmatpush1.msra.mxu0 0.0
    %337 = vmatprep.subr.mxu0 0.0
    %338 = vmatpush1.msra.mxu0 0.0
    %339 = vmatprep.subr.mxu0 0.0
    %340 = vmatpush1.msra.mxu0 0.0
    %341 = vmatprep.subr.mxu0 0.0
    %342 = vmatpush1.msra.mxu0 0.0
    %343 = vmatprep.subr.mxu0 0.0
    %344 = vmatpush1.msra.mxu0 0.0
    %345 = vmatprep.subr.mxu0 0.0
    %346 = vmatpush1.msra.mxu0 0.0
    %347 = vmatprep.subr.mxu0 0.0
    %348 = vmatpush1.msra.mxu0 0.0
    %349 = vmatprep.subr.mxu0 0.0
    %350 = vmatpush1.msra.mxu0 0.0
    %351 = vmatprep.subr.mxu0 0.0
    %352 = vmatpush1.msra.mxu0 0.0
    %353 = vmatprep.subr.mxu0 0.0
    %354 = vmatpush1.msra.mxu0 0.0
    %355 = vmatprep.subr.mxu0 0.0
    %356 = vmatpush1.msra.mxu0 0.0
    %357 = vmatprep.subr.mxu0 0.0
    %358 = vmatpush1.msra.mxu0 0.0
    %359 = vmatprep.subr.mxu0 0.0
    %360 = vmatpush1.msra.mxu0 0.0
    %361 = vmatprep.subr.mxu0 0.0
    %362 = vmatpush1.msra.mxu0 0.0
    %363 = vmatprep.subr.mxu0 0.0
    %364 = vmatpush1.msra.mxu0 0.0
    %365 = vmatprep.subr.mxu0 0.0
    %366 = vmatpush1.msra.mxu0 0.0
    %367 = vmatprep.subr.mxu0 0.0
    %368 = vmatpush1.msra.mxu0 0.0
    %369 = vmatprep.subr.mxu0 0.0
    %370 = vmatpush1.msra.mxu0 0.0
    %371 = vmatprep.subr.mxu0 0.0
    %372 = vmatpush1.msra.mxu0 0.0
    %373 = vmatprep.subr.mxu0 0.0
    %374 = vmatpush1.msra.mxu0 0.0
    %375 = vmatprep.subr.mxu0 0.0
    %376 = vmatpush1.msra.mxu0 0.0
    %377 = vmatprep.subr.mxu0 0.0
    %378 = vmatpush1.msra.mxu0 0.0
    %379 = vmatprep.subr.mxu0 0.0
    %380 = vmatpush1.msra.mxu0 0.0
    %381 = vmatprep.subr.mxu0 0.0
    %382 = vmatpush1.msra.mxu0 0.0
    %383 = vmatprep.subr.mxu0 0.0
    %384 = vmatpush1.msra.mxu0 0.0
    %385 = vmatprep.subr.mxu0 0.0
    %386 = vmatpush1.msra.mxu0 0.0
    %387 = vmatprep.subr.mxu0 0.0
    %388 = vmatpush1.msra.mxu0 0.0
    %389 = vmatprep.subr.mxu0 0.0
    %390 = vmatpush1.msra.mxu0 0.0
    %391 = vmatprep.subr.mxu0 0.0
    %392 = vmatpush1.msra.mxu0 0.0
    %393 = vmatprep.subr.mxu0 0.0
    %394 = vmatpush1.msra.mxu0 0.0
    %395 = vmatprep.mubr.f32.mxu0 0.0
    %396 = vmatmul.mubr.f32.gmra.mrb[0].mxu0 %v325
    %v397 = vpop.f32.mrb[0].mxu0
    %v398 = vadd.f32 0.0, %v397
    %v399 = vpop.f32.mrb[0].mxu0
    %400 = vdwg.mxu0
    %v401 = vmul.f32 %v398, %v321
    %v402 = vsel %vm152, %v401, 0.0
    %403 = vadd.xlane.f32.xlu0 %v402
    %v404 = vpop.xlane.xlu0 %403
    %v406 = vsel %vm327, %v318, 0
    %408 = vmatprep.subr.mxu0 0.0
    %409 = vmatpush1.msra.mxu0 %v406
    %410 = vmatprep.subr.mxu0 0.0
    %411 = vmatpush1.msra.mxu0 0.0
    %412 = vmatprep.subr.mxu0 0.0
    %413 = vmatpush1.msra.mxu0 0.0
    %414 = vmatprep.subr.mxu0 0.0
    %415 = vmatpush1.msra.mxu0 0.0
    %416 = vmatprep.subr.mxu0 0.0
    %417 = vmatpush1.msra.mxu0 0.0
    %418 = vmatprep.subr.mxu0 0.0
    %419 = vmatpush1.msra.mxu0 0.0
    %420 = vmatprep.subr.mxu0 0.0
    %421 = vmatpush1.msra.mxu0 0.0
    %422 = vmatprep.subr.mxu0 0.0
    %423 = vmatpush1.msra.mxu0 0.0
    %424 = vmatprep.subr.mxu0 0.0
    %425 = vmatpush1.msra.mxu0 0.0
    %426 = vmatprep.subr.mxu0 0.0
    %427 = vmatpush1.msra.mxu0 0.0
    %428 = vmatprep.subr.mxu0 0.0
    %429 = vmatpush1.msra.mxu0 0.0
    %430 = vmatprep.subr.mxu0 0.0
    %431 = vmatpush1.msra.mxu0 0.0
    %432 = vmatprep.subr.mxu0 0.0
    %433 = vmatpush1.msra.mxu0 0.0
    %434 = vmatprep.subr.mxu0 0.0
    %435 = vmatpush1.msra.mxu0 0.0
    %436 = vmatprep.subr.mxu0 0.0
    %437 = vmatpush1.msra.mxu0 0.0
    %438 = vmatprep.subr.mxu0 0.0
    %439 = vmatpush1.msra.mxu0 0.0
    %440 = vmatprep.subr.mxu0 0.0
    %441 = vmatpush1.msra.mxu0 0.0
    %442 = vmatprep.subr.mxu0 0.0
    %443 = vmatpush1.msra.mxu0 0.0
    %444 = vmatprep.subr.mxu0 0.0
    %445 = vmatpush1.msra.mxu0 0.0
    %446 = vmatprep.subr.mxu0 0.0
    %447 = vmatpush1.msra.mxu0 0.0
    %448 = vmatprep.subr.mxu0 0.0
    %449 = vmatpush1.msra.mxu0 0.0
    %450 = vmatprep.subr.mxu0 0.0
    %451 = vmatpush1.msra.mxu0 0.0
    %452 = vmatprep.subr.mxu0 0.0
    %453 = vmatpush1.msra.mxu0 0.0
    %454 = vmatprep.subr.mxu0 0.0
    %455 = vmatpush1.msra.mxu0 0.0
    %456 = vmatprep.subr.mxu0 0.0
    %457 = vmatpush1.msra.mxu0 0.0
    %458 = vmatprep.subr.mxu0 0.0
    %459 = vmatpush1.msra.mxu0 0.0
    %460 = vmatprep.subr.mxu0 0.0
    %461 = vmatpush1.msra.mxu0 0.0
    %462 = vmatprep.subr.mxu0 0.0
    %463 = vmatpush1.msra.mxu0 0.0
    %464 = vmatprep.subr.mxu0 0.0
    %465 = vmatpush1.msra.mxu0 0.0
    %466 = vmatprep.subr.mxu0 0.0
    %467 = vmatpush1.msra.mxu0 0.0
    %468 = vmatprep.subr.mxu0 0.0
    %469 = vmatpush1.msra.mxu0 0.0
    %470 = vmatprep.subr.mxu0 0.0
    %471 = vmatpush1.msra.mxu0 0.0
    %472 = vmatprep.mubr.f32.mxu0 0.0
    %473 = vmatmul.mubr.f32.gmra.mrb[0].mxu0 %v325
    %v474 = vpop.f32.mrb[0].mxu0
    %v475 = vadd.f32 0.0, %v474
    %v476 = vpop.f32.mrb[0].mxu0
    %477 = vdwg.mxu0
    %v478 = vmul.f32 %v475, %v321
    %v479 = vsel %vm152, %v478, 0.0
    %480 = vadd.xlane.f32.xlu0 %v479
    %v481 = vpop.xlane.xlu0 %480
    %v482 = vmul.f32 %v60, %v404
    %v483 = vmul.f32 %v61, %v404
    %v484 = vadd.f32 %v482, %v481
    %v485 = vadd.f32 %v483, %v481
    %486 = vst [vmem:[#allocation7] sm:$0xff] %v484
    %487 = vst [vmem:[#allocation7 + $0x8] sm:$0xff] %v485
    // Predicated region
    $region50: #{tpu_custom_call.1} parent=1 // pred_check
      _
    $region51: #{tpu_custom_call.1} parent=1 // pred_check_branch
      %489 = sbr.rel (0) target = $region53
    $region52: #{tpu_custom_call.1} parent=1 // pred_region
      %s491 = ssub.s32 256, 256
      %492 = vsyncadd [#allocation4], %s491
      %s494 = sshll.u32 [#allocation7], 4
      %s495 = int_to_ptr.vmem [resolvable:$true] %s494
      %497 = dma.vmem_to_hbm [thread:$0]  %s495, 256, %s10, [#allocation4]
    $region53: #{tpu_custom_call.1} parent=1 // pred_fallthru
      _
    // Predicated region
    $region54: #{tpu_custom_call.1} parent=1 // pred_check
      _
    $region55: #{tpu_custom_call.1} parent=1 // pred_check_branch
      %499 = sbr.rel (0) target = $region57
    $region56: #{tpu_custom_call.1} parent=1 // pred_region
      %500 = dma.done [#allocation4], 256
    $region57: #{tpu_custom_call.1} parent=1 // pred_fallthru
      _
    %501 = vsyncpa [#allocation3], 1
    %502 = vsyncpa [#allocation6], 1
    %503 = vsyncpa [#allocation4], 1

</llo_original>
